<compile_context>
chip_gen: v7x
topology: tpu7x:2x2x1
jax: 0.10.0
libtpu: 0.0.40
codegen_flags: <defaults>
</compile_context>

<pallas_src>
import functools

import jax
import jax.numpy as jnp
from jax import lax
from jax.experimental import pallas as pl
from jax.experimental.pallas import tpu as pltpu

HIDDEN_DIM_CNN = 32
KSIZE = 5
FC1_OUT = 256


def _cdiv(a, b):
    return -(-a // b)


def _round_up(x, m):
    return _cdiv(x, m) * m


def _num_tensorcores():
    """1 for v5e/v6e (single TensorCore per chip), 2 for v7x."""
    try:
        kind = (getattr(jax.devices()[0], "device_kind", "") or "").lower()
        return 2 if "v7" in kind else 1
    except Exception:
        return 1


def _per_row_vmem_bytes(L, F_pad, na_pad, itemsize):
    # double-buffered input/output tiles + f32 in-kernel intermediates (z, pooled, h, fc2 acc)
    return (2 * L * itemsize + 2 * na_pad * 4
            + 2 * F_pad * 4 + F_pad * 4 + FC1_OUT * 4 + na_pad * 4)


def _choose_tb(batch, L, F_pad, na_pad, n_tc, itemsize, act_budget=16 << 20):
    """Batch tile: fewest grid steps on 1-TC chips, even grid count on v7x, VMEM-clamped."""
    bp = _round_up(batch, 8)
    per_row = _per_row_vmem_bytes(L, F_pad, na_pad, itemsize)
    max_tb = max(8, min(1024, (act_budget // per_row) // 8 * 8))
    if n_tc >= 2:
        steps = max(2, 2 * _cdiv(_cdiv(bp, max_tb), 2))  # even -> both v7x TCs get equal work
    else:
        steps = _cdiv(bp, max_tb)                        # sequential grid loop: minimize steps
    return min(max_tb, _round_up(_cdiv(bp, steps), 8))


def _const_block(shape):
    """BlockSpec for a grid-invariant weight block: single-buffered (never re-fetched)."""
    idx = lambda b: (0,) * len(shape)
    try:
        return pl.BlockSpec(shape, idx, pipeline_mode=pl.Buffered(1))
    except Exception:  # pipeline_mode unavailable in this JAX version -> default buffering
        return pl.BlockSpec(shape, idx)


def _cnn_kernel(x_ref, wconv_ref, bconv_ref, w1t_ref, b1_ref, w2t_ref, b2_ref, out_ref):
    # One batch tile (TB samples) per grid step; all matmuls accumulate in f32 on the MXU.
    x = x_ref[...]                                                        # (TB, L)
    # conv1d (even|odd output positions stacked along N) as one banded matmul; the conv's
    # zero padding is already folded into wconv's band structure.
    z = jnp.dot(x, wconv_ref[...], preferred_element_type=jnp.float32)    # (TB, 2*F_pad)
    z = jnp.maximum(z + bconv_ref[...], 0.0)                              # bias + ReLU
    f = z.shape[1] // 2                                                   # F_pad (mult of 128)
    pooled = jnp.maximum(z[:, :f], z[:, f:])                              # maxpool1d(2), lane-aligned
    # fc1 (K = F_pad) + ReLU
    h = jnp.dot(pooled.astype(w1t_ref.dtype), w1t_ref[...],
                preferred_element_type=jnp.float32) + b1_ref[...]
    h = jnp.maximum(h, 0.0)                                               # (TB, 256)
    # fc2 into the 128-lane-padded output slab (lane-dense writeback)
    out_ref[...] = (jnp.dot(h.astype(w2t_ref.dtype), w2t_ref[...],
                            preferred_element_type=jnp.float32) + b2_ref[...])


def prepare_kernel_params(params, input_dim, *, compute_dtype=jnp.float32):
    """One-time (per parameter update) weight-side glue, hoisted out of the forward path."""
    wc, bc, w1, b1, w2, b2 = (params[k] for k in ("wc", "bc", "w1", "b1", "w2", "b2"))
    C, K, L = HIDDEN_DIM_CNN, KSIZE, input_dim
    assert L % 2 == 0
    Lh = L // 2
    F = C * Lh
    F_pad = _round_up(F, 128)                     # lane-aligned pool halves for any L
    n_action = w2.shape[0]
    na_pad = _round_up(max(n_action, 1), 128)

    # Banded conv weights; columns in torch Flatten order c*Lh + p, even-output-position half
    # then odd half; conv zero-padding folded into the band (rows indexed by raw input pos).
    wcs = wc[:, 0, :]                                                     # (C, K)
    i = jnp.arange(L)[:, None, None]                                      # input position
    c = jnp.arange(C)[None, :, None]
    p = jnp.arange(Lh)[None, None, :]

    def band(offset):
        k = i - (2 * p + offset) + K // 2                                 # tap index
        w = wcs[c, jnp.clip(k, 0, K - 1)]
        w = jnp.where((k >= 0) & (k < K), w, 0.0).reshape(L, F)
        return jnp.pad(w, ((0, 0), (0, F_pad - F)))

    wconv = jnp.concatenate([band(0), band(1)], axis=1).astype(compute_dtype)    # (L, 2*F_pad)
    bhalf = jnp.pad(jnp.repeat(bc, Lh), (0, F_pad - F))
    bconv = jnp.concatenate([bhalf, bhalf])[None, :].astype(jnp.float32)         # (1, 2*F_pad)

    w1t = jnp.pad(w1.T, ((0, F_pad - F), (0, 0))).astype(compute_dtype)          # (F_pad, 256)
    b1r = b1.reshape(1, FC1_OUT).astype(jnp.float32)
    w2t = jnp.pad(w2.T, ((0, 0), (0, na_pad - n_action))).astype(compute_dtype)  # (256, na_pad)
    b2r = jnp.pad(b2, (0, na_pad - n_action)).reshape(1, na_pad).astype(jnp.float32)
    return dict(wconv=wconv, bconv=bconv, w1t=w1t, b1=b1r, w2t=w2t, b2=b2r)


@functools.partial(jax.jit, static_argnames=("n_action", "n_tc", "tb"))
def cnn_layer_forward(x, kparams, *, n_action, n_tc=1, tb=None):
    """x: (B, 1, L) float32 (PyTorch NCL). Returns (B, n_action) float32."""
    wconv, bconv, w1t, b1r, w2t, b2r = (
        kparams[k] for k in ("wconv", "bconv", "w1t", "b1", "w2t", "b2"))
    B, c_in, L = x.shape
    assert c_in == 1
    F2 = wconv.shape[1]                      # 2 * F_pad
    F_pad = F2 // 2
    na_pad = w2t.shape[1]
    itemsize = jnp.dtype(wconv.dtype).itemsize

    if tb is None:
        tb = _choose_tb(B, L, F_pad, na_pad, n_tc, itemsize)
    Bp = _round_up(B, tb)
    grid = Bp // tb

    x2d = x[:, 0, :].astype(wconv.dtype)                 # raw rows, no conv padding needed
    if Bp != B:
        x2d = jnp.pad(x2d, ((0, Bp - B), (0, 0)))        # zero rows for padded batch entries

    weight_bytes = ((wconv.size + w1t.size + w2t.size) * itemsize
                    + (bconv.size + b1r.size + b2r.size) * 4)
    act_bytes = tb * _per_row_vmem_bytes(L, F_pad, na_pad, itemsize)
    # TODO(synk): for very large L the band matrix itself outgrows v7x VMEM; add a K-blocked
    # grid axis (accumulate fc1 in VMEM scratch) or a direct 5-tap shifted-MAC conv path.
    vmem_limit = int(min(max(2 * (weight_bytes + act_bytes), 32 << 20), 60 << 20))

    flops = 2 * Bp * (L * F2 + F_pad * FC1_OUT + FC1_OUT * na_pad)
    cost = pl.CostEstimate(flops=flops, transcendentals=0,
                           bytes_accessed=Bp * L * itemsize + Bp * na_pad * 4 + weight_bytes)

    grid_spec = pltpu.PrefetchScalarGridSpec(
        num_scalar_prefetch=0,
        grid=(grid,),
        in_specs=[
            pl.BlockSpec((tb, L), lambda b: (b, 0)),      # batch-tiled raw rows
            _const_block((L, F2)),                        # banded conv weights
            _const_block((1, F2)),                        # conv bias (replicated)
            _const_block((F_pad, FC1_OUT)),               # fc1 weight^T (zero-padded rows)
            _const_block((1, FC1_OUT)),                   # fc1 bias
            _const_block((FC1_OUT, na_pad)),              # fc2 weight^T (lane-padded cols)
            _const_block((1, na_pad)),                    # fc2 bias (lane-padded)
        ],
        out_specs=pl.BlockSpec((tb, na_pad), lambda b: (b, 0)),
    )
    out = pl.pallas_call(
        _cnn_kernel,
        out_shape=jax.ShapeDtypeStruct((Bp, na_pad), jnp.float32),
        grid_spec=grid_spec,
        compiler_params=pltpu.CompilerParams(
            dimension_semantics=("parallel",),
            vmem_limit_bytes=vmem_limit),
        cost_estimate=cost,
    )(x2d, wconv, bconv, w1t, b1r, w2t, b2r)
    return out[:B, :n_action]


def init_params(key, input_dim, n_action):
    """Deterministic synthetic parameters matching the torch module's shapes."""
    ks = jax.random.split(key, 6)
    C = HIDDEN_DIM_CNN
    fan_c = 1 * KSIZE
    fan_1 = C * input_dim // 2
    u = lambda k, shp, fan: jax.random.uniform(k, shp, jnp.float32, -1.0, 1.0) / jnp.sqrt(fan)
    return dict(
        wc=u(ks[0], (C, 1, KSIZE), fan_c),          # conv1.weight (32, 1, 5)
        bc=u(ks[1], (C,), fan_c),                   # conv1.bias   (32,)
        w1=u(ks[2], (FC1_OUT, fan_1), fan_1),       # fc1.weight   (256, 32*L//2)
        b1=u(ks[3], (FC1_OUT,), fan_1),             # fc1.bias     (256,)
        w2=u(ks[4], (n_action, FC1_OUT), FC1_OUT),  # fc2.weight   (n_action, 256)
        b2=u(ks[5], (n_action,), FC1_OUT),          # fc2.bias     (n_action,)
    )


def reference_forward(x, params):
    """Pure-JAX reference reproducing the PyTorch forward exactly."""
    wc, bc, w1, b1, w2, b2 = (params[k] for k in ("wc", "bc", "w1", "b1", "w2", "b2"))
    B, _, L = x.shape
    conv = lax.conv_general_dilated(
        x, wc, window_strides=(1,), padding=((2, 2),),
        dimension_numbers=("NCH", "OIH", "NCH")) + bc[None, :, None]      # (B, C, L)
    conv = jnp.maximum(conv, 0.0)
    pooled = conv.reshape(B, HIDDEN_DIM_CNN, L // 2, 2).max(axis=-1)      # (B, C, L//2)
    flat = pooled.reshape(B, HIDDEN_DIM_CNN * (L // 2))                   # torch Flatten
    h = jnp.maximum(flat @ w1.T + b1, 0.0)
    return h @ w2.T + b2


if __name__ == "__main__":
    input_dim, n_action = 16, 4
    key = jax.random.PRNGKey(0)
    kx, kp = jax.random.split(key)
    params = init_params(kp, input_dim, n_action)
    n_tc = _num_tensorcores()

    # f32 validation path (exact vs. the pure-JAX reference).
    kf32 = prepare_kernel_params(params, input_dim)
    # (B, tb): single-step auto tile, auto tile at B=32, and forced multi-step + batch padding.
    for B, tb in ((2, None), (32, None), (20, 8)):
        x = jax.random.normal(jax.random.fold_in(kx, B), (B, 1, input_dim), dtype=jnp.float32)
        out = jax.block_until_ready(
            cnn_layer_forward(x, kf32, n_action=n_action, n_tc=n_tc, tb=tb))
        ref = reference_forward(x, params)
        assert out.shape == (B, n_action)
        assert jnp.allclose(out, ref, atol=1e-4, rtol=1e-4), float(jnp.abs(out - ref).max())

    # bf16 compute path (MXU throughput option): bf16 operands, f32 accumulation.
    kbf16 = prepare_kernel_params(params, input_dim, compute_dtype=jnp.bfloat16)
    x = jax.random.normal(jax.random.fold_in(kx, 777), (32, 1, input_dim), dtype=jnp.float32)
    out = jax.block_until_ready(cnn_layer_forward(x, kbf16, n_action=n_action, n_tc=n_tc))
    ref = reference_forward(x, params)
    assert out.shape == (32, n_action)
    assert jnp.allclose(out, ref, atol=1e-1, rtol=1e-1), float(jnp.abs(out - ref).max())

    print("KERNEL_OK")
</pallas_src>

<mosaic_0001>
module attributes {stable_mosaic.version = 11 : i64} {
  func.func @_cnn_kernel(%arg0: i32, %arg1: memref<8x16xf32, #tpu.memory_space<vmem>>, %arg2: memref<16x512xf32, #tpu.memory_space<vmem>>, %arg3: memref<1x512xf32, #tpu.memory_space<vmem>>, %arg4: memref<256x256xf32, #tpu.memory_space<vmem>>, %arg5: memref<1x256xf32, #tpu.memory_space<vmem>>, %arg6: memref<256x128xf32, #tpu.memory_space<vmem>>, %arg7: memref<1x128xf32, #tpu.memory_space<vmem>>, %arg8: memref<8x128xf32, #tpu.memory_space<vmem>>) attributes {dimension_semantics = [#tpu.dimension_semantics<parallel>], iteration_bounds = array<i64: 1>, scalar_prefetch = 0 : i64, scratch_operands = 0 : i64, tpu.core_type = #tpu.core_type<tc>, window_params = [{transform_indices = @transform_0, window_bounds = array<i64: 8, 16>}, {pipeline_mode = #tpu.pipeline_mode<synchronous>, transform_indices = @transform_1, window_bounds = array<i64: 16, 512>}, {pipeline_mode = #tpu.pipeline_mode<synchronous>, transform_indices = @transform_2, window_bounds = array<i64: 1, 512>}, {pipeline_mode = #tpu.pipeline_mode<synchronous>, transform_indices = @transform_3, window_bounds = array<i64: 256, 256>}, {pipeline_mode = #tpu.pipeline_mode<synchronous>, transform_indices = @transform_4, window_bounds = array<i64: 1, 256>}, {pipeline_mode = #tpu.pipeline_mode<synchronous>, transform_indices = @transform_5, window_bounds = array<i64: 256, 128>}, {pipeline_mode = #tpu.pipeline_mode<synchronous>, transform_indices = @transform_6, window_bounds = array<i64: 1, 128>}, {transform_indices = @transform_7, window_bounds = array<i64: 8, 128>}]} {
    %c0 = arith.constant 0 : index
    %c0_0 = arith.constant 0 : index
    %0 = vector.load %arg1[%c0, %c0_0] : memref<8x16xf32, #tpu.memory_space<vmem>>, vector<8x16xf32>
    %c0_1 = arith.constant 0 : index
    %c0_2 = arith.constant 0 : index
    %1 = vector.load %arg2[%c0_1, %c0_2] : memref<16x512xf32, #tpu.memory_space<vmem>>, vector<16x512xf32>
    %cst = arith.constant dense<0.000000e+00> : vector<8x512xf32>
    %2 = tpu.matmul %0, %1, %cst {dimension_numbers = #tpu.dot_dimension_numbers<[1], [0], [0], [1], [0, 0, 1, 1], [], []>} : vector<8x16xf32>, vector<16x512xf32>, vector<8x512xf32> -> vector<8x512xf32>
    %c0_3 = arith.constant 0 : index
    %c0_4 = arith.constant 0 : index
    %3 = vector.load %arg3[%c0_3, %c0_4] : memref<1x512xf32, #tpu.memory_space<vmem>>, vector<1x512xf32>
    %4 = vector.broadcast %3 : vector<1x512xf32> to vector<8x512xf32>
    %5 = arith.addf %2, %4 : vector<8x512xf32>
    %cst_5 = arith.constant 0.000000e+00 : f32
    %6 = vector.broadcast %cst_5 : f32 to vector<8x512xf32>
    %7 = arith.maximumf %5, %6 : vector<8x512xf32>
    %8 = vector.extract_strided_slice %7 {offsets = [0, 0], sizes = [8, 256], strides = [1, 1]} : vector<8x512xf32> to vector<8x256xf32>
    %9 = vector.extract_strided_slice %7 {offsets = [0, 256], sizes = [8, 256], strides = [1, 1]} : vector<8x512xf32> to vector<8x256xf32>
    %10 = arith.maximumf %8, %9 : vector<8x256xf32>
    %c0_6 = arith.constant 0 : index
    %c0_7 = arith.constant 0 : index
    %11 = vector.load %arg4[%c0_6, %c0_7] : memref<256x256xf32, #tpu.memory_space<vmem>>, vector<256x256xf32>
    %cst_8 = arith.constant dense<0.000000e+00> : vector<8x256xf32>
    %12 = tpu.matmul %10, %11, %cst_8 {dimension_numbers = #tpu.dot_dimension_numbers<[1], [0], [0], [1], [0, 0, 1, 1], [], []>} : vector<8x256xf32>, vector<256x256xf32>, vector<8x256xf32> -> vector<8x256xf32>
    %c0_9 = arith.constant 0 : index
    %c0_10 = arith.constant 0 : index
    %13 = vector.load %arg5[%c0_9, %c0_10] : memref<1x256xf32, #tpu.memory_space<vmem>>, vector<1x256xf32>
    %14 = vector.broadcast %13 : vector<1x256xf32> to vector<8x256xf32>
    %15 = arith.addf %12, %14 : vector<8x256xf32>
    %cst_11 = arith.constant 0.000000e+00 : f32
    %16 = vector.broadcast %cst_11 : f32 to vector<8x256xf32>
    %17 = arith.maximumf %15, %16 : vector<8x256xf32>
    %c0_12 = arith.constant 0 : index
    %c0_13 = arith.constant 0 : index
    %18 = vector.load %arg6[%c0_12, %c0_13] : memref<256x128xf32, #tpu.memory_space<vmem>>, vector<256x128xf32>
    %cst_14 = arith.constant dense<0.000000e+00> : vector<8x128xf32>
    %19 = tpu.matmul %17, %18, %cst_14 {dimension_numbers = #tpu.dot_dimension_numbers<[1], [0], [0], [1], [0, 0, 1, 1], [], []>} : vector<8x256xf32>, vector<256x128xf32>, vector<8x128xf32> -> vector<8x128xf32>
    %c0_15 = arith.constant 0 : index
    %c0_16 = arith.constant 0 : index
    %20 = vector.load %arg7[%c0_15, %c0_16] : memref<1x128xf32, #tpu.memory_space<vmem>>, vector<1x128xf32>
    %21 = vector.broadcast %20 : vector<1x128xf32> to vector<8x128xf32>
    %22 = arith.addf %19, %21 : vector<8x128xf32>
    %c0_17 = arith.constant 0 : index
    %c0_18 = arith.constant 0 : index
    %23 = vector.load %arg8[%c0_17, %c0_18] : memref<8x128xf32, #tpu.memory_space<vmem>>, vector<8x128xf32>
    tpu.vector_store %arg8[%c0_17, %c0_18], %22 {strides = array<i32>} : memref<8x128xf32, #tpu.memory_space<vmem>>, vector<8x128xf32>,
    return
  }
  func.func @transform_0(%arg0: i32) -> (i32, i32) {
    %c0_i32 = arith.constant 0 : i32
    %c0_i32_0 = arith.constant 0 : i32
    return %arg0, %c0_i32 : i32, i32
  }
  func.func @transform_1(%arg0: i32) -> (i32, i32) {
    %c0_i32 = arith.constant 0 : i32
    %c0_i32_0 = arith.constant 0 : i32
    %c0_i32_1 = arith.constant 0 : i32
    return %c0_i32, %c0_i32_0 : i32, i32
  }
  func.func @transform_2(%arg0: i32) -> (i32, i32) {
    %c0_i32 = arith.constant 0 : i32
    %c0_i32_0 = arith.constant 0 : i32
    %c0_i32_1 = arith.constant 0 : i32
    return %c0_i32, %c0_i32_0 : i32, i32
  }
  func.func @transform_3(%arg0: i32) -> (i32, i32) {
    %c0_i32 = arith.constant 0 : i32
    %c0_i32_0 = arith.constant 0 : i32
    %c0_i32_1 = arith.constant 0 : i32
    return %c0_i32, %c0_i32_0 : i32, i32
  }
  func.func @transform_4(%arg0: i32) -> (i32, i32) {
    %c0_i32 = arith.constant 0 : i32
    %c0_i32_0 = arith.constant 0 : i32
    %c0_i32_1 = arith.constant 0 : i32
    return %c0_i32, %c0_i32_0 : i32, i32
  }
  func.func @transform_5(%arg0: i32) -> (i32, i32) {
    %c0_i32 = arith.constant 0 : i32
    %c0_i32_0 = arith.constant 0 : i32
    %c0_i32_1 = arith.constant 0 : i32
    return %c0_i32, %c0_i32_0 : i32, i32
  }
  func.func @transform_6(%arg0: i32) -> (i32, i32) {
    %c0_i32 = arith.constant 0 : i32
    %c0_i32_0 = arith.constant 0 : i32
    %c0_i32_1 = arith.constant 0 : i32
    return %c0_i32, %c0_i32_0 : i32, i32
  }
  func.func @transform_7(%arg0: i32) -> (i32, i32) {
    %c0_i32 = arith.constant 0 : i32
    %c0_i32_0 = arith.constant 0 : i32
    return %arg0, %c0_i32 : i32, i32
  }
}

</mosaic_0001>

<llo_original>
// kernel: cnn_layer_forward.1
$region0: #{cnn_layer_forward.1}
  #allocation0 [shape = 'u32[]', space=smem, size = 0x4, offset = 0x4, fixed_abs, tag = 'smem constant byte address 0x4 - core index']
  #allocation1 [shape = 'u32[144,128]{1,0:T(1,128)}', space=vmem, size = 0x12000, scoped, tag = 'internal scratch']
  %s0 = inlined_call_operand.vmem [shape: f32[8,16], index: 0, kind: input, shape index: {}]
  %s1 = inlined_call_operand.hbm [shape: f32[16,512], index: 1, kind: input, shape index: {}]
  %s2 = inlined_call_operand.vmem [shape: f32[1,512], index: 2, kind: input, shape index: {}]
  %s3 = inlined_call_operand.hbm [shape: f32[256,256], index: 3, kind: input, shape index: {}]
  %s4 = inlined_call_operand.vmem [shape: f32[1,256], index: 4, kind: input, shape index: {}]
  %s5 = inlined_call_operand.hbm [shape: f32[256,128], index: 5, kind: input, shape index: {}]
  %s6 = inlined_call_operand.vmem [shape: f32[1,128], index: 6, kind: input, shape index: {}]
  %s7 = inlined_call_operand.vmem [shape: f32[8,128], index: 7, kind: output, shape index: {}]
  %s8 = sld [smem:[#allocation0]]
  $region50: #{cnn_layer_forward.1} parent=0
    _
  %s10 = ssub.s32 1, %s8
  %s11 = scalar_select 0, %s10, %s8
  $region1: #{cnn_layer_forward.1} parent=0
    #allocation2 [shape = 'u8[32768]{0}', space=vmem, size = 0x8000, scoped, tag = 'input window, operand 1, single buffered']
    #allocation3 [shape = 's32[1]{0}', space=sflag, size = 0x4, scoped, tag = 'scoped memory for cnn_layer_forward.1']
    #allocation4 [shape = 'u8[262144]{0}', space=vmem, size = 0x40000, scoped, tag = 'input window, operand 3, single buffered']
    #allocation5 [shape = 's32[1]{0}', space=sflag, size = 0x4, scoped, tag = 'scoped memory for cnn_layer_forward.1']
    #allocation6 [shape = 'u8[131072]{0}', space=vmem, size = 0x20000, scoped, tag = 'input window, operand 5, single buffered']
    %12 = vsyncpa [#allocation3], 0
    %13 = vsyncpa [#allocation5], 0
    // Predicated region
    $region2: #{cnn_layer_forward.1} parent=1 // pred_check
      _
    $region3: #{cnn_layer_forward.1} parent=1 // pred_check_branch
      %15 = sbr.rel (0) target = $region5
    $region4: #{cnn_layer_forward.1} parent=1 // pred_region
      _
    $region5: #{cnn_layer_forward.1} parent=1 // pred_fallthru
      _
    // Predicated region
    $region6: #{cnn_layer_forward.1} parent=1 // pred_check
      _
    $region7: #{cnn_layer_forward.1} parent=1 // pred_check_branch
      %17 = sbr.rel (0) target = $region9
    $region8: #{cnn_layer_forward.1} parent=1 // pred_region
      %s19 = ssub.s32 1024, 1024
      %20 = vsyncadd [#allocation3], %s19
      %s21 = sshll.u32 [#allocation2], 4
      %s22 = int_to_ptr.vmem [resolvable:$true] %s21
      %27 = dma.hbm_to_vmem [thread:$0]  %s1, 1024, %s22, [#allocation3], 512, 512, 32
    $region9: #{cnn_layer_forward.1} parent=1 // pred_fallthru
      _
    // Predicated region
    $region10: #{cnn_layer_forward.1} parent=1 // pred_check
      _
    $region11: #{cnn_layer_forward.1} parent=1 // pred_check_branch
      %29 = sbr.rel (0) target = $region13
    $region12: #{cnn_layer_forward.1} parent=1 // pred_region
      _
    $region13: #{cnn_layer_forward.1} parent=1 // pred_fallthru
      _
    // Predicated region
    $region14: #{cnn_layer_forward.1} parent=1 // pred_check
      _
    $region15: #{cnn_layer_forward.1} parent=1 // pred_check_branch
      %31 = sbr.rel (0) target = $region17
    $region16: #{cnn_layer_forward.1} parent=1 // pred_region
      %s33 = ssub.s32 8192, 8192
      %34 = vsyncadd [#allocation5], %s33
      %s35 = sshll.u32 [#allocation4], 4
      %s36 = int_to_ptr.vmem [resolvable:$true] %s35
      %41 = dma.hbm_to_vmem [thread:$0]  %s3, 8192, %s36, [#allocation5], 256, 256, 16
    $region17: #{cnn_layer_forward.1} parent=1 // pred_fallthru
      _
    // Predicated region
    $region18: #{cnn_layer_forward.1} parent=1 // pred_check
      _
    $region19: #{cnn_layer_forward.1} parent=1 // pred_check_branch
      %43 = sbr.rel (0) target = $region21
    $region20: #{cnn_layer_forward.1} parent=1 // pred_region
      _
    $region21: #{cnn_layer_forward.1} parent=1 // pred_fallthru
      _
    // Predicated region
    $region22: #{cnn_layer_forward.1} parent=1 // pred_check
      _
    $region23: #{cnn_layer_forward.1} parent=1 // pred_check_branch
      %45 = sbr.rel (0) target = $region25
    $region24: #{cnn_layer_forward.1} parent=1 // pred_region
      %s47 = ssub.s32 4096, 4096
      %48 = vsyncadd [#allocation5], %s47
      %s49 = sshll.u32 [#allocation6], 4
      %s50 = int_to_ptr.vmem [resolvable:$true] %s49
      %55 = dma.hbm_to_vmem [thread:$0]  %s5, 4096, %s50, [#allocation5], 128, 128, 8
    $region25: #{cnn_layer_forward.1} parent=1 // pred_fallthru
      _
    // Predicated region
    $region26: #{cnn_layer_forward.1} parent=1 // pred_check
      _
    $region27: #{cnn_layer_forward.1} parent=1 // pred_check_branch
      %57 = sbr.rel (0) target = $region29
    $region28: #{cnn_layer_forward.1} parent=1 // pred_region
      _
    $region29: #{cnn_layer_forward.1} parent=1 // pred_fallthru
      _
    // Predicated region
    $region30: #{cnn_layer_forward.1} parent=1 // pred_check
      _
    $region31: #{cnn_layer_forward.1} parent=1 // pred_check_branch
      %59 = sbr.rel (0) target = $region33
    $region32: #{cnn_layer_forward.1} parent=1 // pred_region
      %60 = dma.done [#allocation3], 1024
    $region33: #{cnn_layer_forward.1} parent=1 // pred_fallthru
      _
    // Predicated region
    $region34: #{cnn_layer_forward.1} parent=1 // pred_check
      _
    $region35: #{cnn_layer_forward.1} parent=1 // pred_check_branch
      %62 = sbr.rel (0) target = $region37
    $region36: #{cnn_layer_forward.1} parent=1 // pred_region
      %63 = dma.done [#allocation5], 8192
    $region37: #{cnn_layer_forward.1} parent=1 // pred_fallthru
      _
    // Predicated region
    $region38: #{cnn_layer_forward.1} parent=1 // pred_check
      _
    $region39: #{cnn_layer_forward.1} parent=1 // pred_check_branch
      %65 = sbr.rel (0) target = $region41
    $region40: #{cnn_layer_forward.1} parent=1 // pred_region
      %66 = dma.done [#allocation5], 4096
    $region41: #{cnn_layer_forward.1} parent=1 // pred_fallthru
      _
    %v67 = vld [vmem:[%s0] sm:$0xff]
    %v68 = vld [vmem:[#allocation2] sm:$0xff]
    %v69 = vld [vmem:[#allocation2 + $0x8] sm:$0xff]
    %v70 = vld [vmem:[#allocation2 + $0x10] sm:$0xff]
    %v71 = vld [vmem:[#allocation2 + $0x18] sm:$0xff]
    %v72 = vld [vmem:[#allocation2 + $0x20] sm:$0xff]
    %v73 = vld [vmem:[#allocation2 + $0x28] sm:$0xff]
    %v74 = vld [vmem:[#allocation2 + $0x30] sm:$0xff]
    %v75 = vld [vmem:[#allocation2 + $0x38] sm:$0xff]
    %v76 = vld [vmem:[%s2] sm:$0xf]
    %v78 = vlaneseq
    %v79 = vshrl.u32 %v78, 7
    %v80 = vsub.s32 0, %v79
    %v81 = vrot.slane %v76, %v80
    %v82 = vlaneseq
    %v83 = vshrl.u32 %v82, 7
    %v84 = vsub.s32 1, %v83
    %v85 = vrot.slane %v76, %v84
    %v86 = vlaneseq
    %v87 = vshrl.u32 %v86, 7
    %v88 = vsub.s32 2, %v87
    %v89 = vrot.slane %v76, %v88
    %v90 = vlaneseq
    %v91 = vshrl.u32 %v90, 7
    %v92 = vsub.s32 3, %v91
    %v93 = vrot.slane %v76, %v92
    %vm98 = vcmask 130048
    %v100 = vsel %vm98, %v67, 0
    %102 = vmatprep.subr.mxu0 %v69
    %103 = vmatpush1.msra.mxu0 %v68
    %104 = vmatprep.subr.mxu0 %v73
    %105 = vmatpush1.msra.mxu0 %v72
    %106 = vmatprep.subr.mxu0 0.0
    %107 = vmatpush1.msra.mxu0 0.0
    %108 = vmatprep.subr.mxu0 0.0
    %109 = vmatpush1.msra.mxu0 0.0
    %110 = vmatprep.subr.mxu0 0.0
    %111 = vmatpush1.msra.mxu0 0.0
    %112 = vmatprep.subr.mxu0 0.0
    %113 = vmatpush1.msra.mxu0 0.0
    %114 = vmatprep.subr.mxu0 0.0
    %115 = vmatpush1.msra.mxu0 0.0
    %116 = vmatprep.subr.mxu0 0.0
    %117 = vmatpush1.msra.mxu0 0.0
    %118 = vmatprep.subr.mxu0 0.0
    %119 = vmatpush1.msra.mxu0 0.0
    %120 = vmatprep.subr.mxu0 0.0
    %121 = vmatpush1.msra.mxu0 0.0
    %122 = vmatprep.subr.mxu0 0.0
    %123 = vmatpush1.msra.mxu0 0.0
    %124 = vmatprep.subr.mxu0 0.0
    %125 = vmatpush1.msra.mxu0 0.0
    %126 = vmatprep.subr.mxu0 0.0
    %127 = vmatpush1.msra.mxu0 0.0
    %128 = vmatprep.subr.mxu0 0.0
    %129 = vmatpush1.msra.mxu0 0.0
    %130 = vmatprep.subr.mxu0 0.0
    %131 = vmatpush1.msra.mxu0 0.0
    %132 = vmatprep.subr.mxu0 0.0
    %133 = vmatpush1.msra.mxu0 0.0
    %134 = vmatprep.subr.mxu0 0.0
    %135 = vmatpush1.msra.mxu0 0.0
    %136 = vmatprep.subr.mxu0 0.0
    %137 = vmatpush1.msra.mxu0 0.0
    %138 = vmatprep.subr.mxu0 0.0
    %139 = vmatpush1.msra.mxu0 0.0
    %140 = vmatprep.subr.mxu0 0.0
    %141 = vmatpush1.msra.mxu0 0.0
    %142 = vmatprep.subr.mxu0 0.0
    %143 = vmatpush1.msra.mxu0 0.0
    %144 = vmatprep.subr.mxu0 0.0
    %145 = vmatpush1.msra.mxu0 0.0
    %146 = vmatprep.subr.mxu0 0.0
    %147 = vmatpush1.msra.mxu0 0.0
    %148 = vmatprep.subr.mxu0 0.0
    %149 = vmatpush1.msra.mxu0 0.0
    %150 = vmatprep.subr.mxu0 0.0
    %151 = vmatpush1.msra.mxu0 0.0
    %152 = vmatprep.subr.mxu0 0.0
    %153 = vmatpush1.msra.mxu0 0.0
    %154 = vmatprep.subr.mxu0 0.0
    %155 = vmatpush1.msra.mxu0 0.0
    %156 = vmatprep.subr.mxu0 0.0
    %157 = vmatpush1.msra.mxu0 0.0
    %158 = vmatprep.subr.mxu0 0.0
    %159 = vmatpush1.msra.mxu0 0.0
    %160 = vmatprep.subr.mxu0 0.0
    %161 = vmatpush1.msra.mxu0 0.0
    %162 = vmatprep.subr.mxu0 0.0
    %163 = vmatpush1.msra.mxu0 0.0
    %164 = vmatprep.subr.mxu0 0.0
    %165 = vmatpush1.msra.mxu0 0.0
    %166 = vmatprep.mubr.f32.mxu0 0.0
    %167 = vmatmul.mubr.f32.gmra.mrb[0].mxu0 %v100
    %v168 = vpop.f32.mrb[0].mxu0
    %v169 = vadd.f32 %v81, %v168
    %v170 = vpop.f32.mrb[0].mxu0
    %v171 = vadd.f32 %v85, %v170
    %172 = vdwg.mxu0
    %173 = vmatprep.subr.mxu0 %v71
    %174 = vmatpush1.msra.mxu0 %v70
    %175 = vmatprep.subr.mxu0 %v75
    %176 = vmatpush1.msra.mxu0 %v74
    %177 = vmatprep.subr.mxu0 0.0
    %178 = vmatpush1.msra.mxu0 0.0
    %179 = vmatprep.subr.mxu0 0.0
    %180 = vmatpush1.msra.mxu0 0.0
    %181 = vmatprep.subr.mxu0 0.0
    %182 = vmatpush1.msra.mxu0 0.0
    %183 = vmatprep.subr.mxu0 0.0
    %184 = vmatpush1.msra.mxu0 0.0
    %185 = vmatprep.subr.mxu0 0.0
    %186 = vmatpush1.msra.mxu0 0.0
    %187 = vmatprep.subr.mxu0 0.0
    %188 = vmatpush1.msra.mxu0 0.0
    %189 = vmatprep.subr.mxu0 0.0
    %190 = vmatpush1.msra.mxu0 0.0
    %191 = vmatprep.subr.mxu0 0.0
    %192 = vmatpush1.msra.mxu0 0.0
    %193 = vmatprep.subr.mxu0 0.0
    %194 = vmatpush1.msra.mxu0 0.0
    %195 = vmatprep.subr.mxu0 0.0
    %196 = vmatpush1.msra.mxu0 0.0
    %197 = vmatprep.subr.mxu0 0.0
    %198 = vmatpush1.msra.mxu0 0.0
    %199 = vmatprep.subr.mxu0 0.0
    %200 = vmatpush1.msra.mxu0 0.0
    %201 = vmatprep.subr.mxu0 0.0
    %202 = vmatpush1.msra.mxu0 0.0
    %203 = vmatprep.subr.mxu0 0.0
    %204 = vmatpush1.msra.mxu0 0.0
    %205 = vmatprep.subr.mxu0 0.0
    %206 = vmatpush1.msra.mxu0 0.0
    %207 = vmatprep.subr.mxu0 0.0
    %208 = vmatpush1.msra.mxu0 0.0
    %209 = vmatprep.subr.mxu0 0.0
    %210 = vmatpush1.msra.mxu0 0.0
    %211 = vmatprep.subr.mxu0 0.0
    %212 = vmatpush1.msra.mxu0 0.0
    %213 = vmatprep.subr.mxu0 0.0
    %214 = vmatpush1.msra.mxu0 0.0
    %215 = vmatprep.subr.mxu0 0.0
    %216 = vmatpush1.msra.mxu0 0.0
    %217 = vmatprep.subr.mxu0 0.0
    %218 = vmatpush1.msra.mxu0 0.0
    %219 = vmatprep.subr.mxu0 0.0
    %220 = vmatpush1.msra.mxu0 0.0
    %221 = vmatprep.subr.mxu0 0.0
    %222 = vmatpush1.msra.mxu0 0.0
    %223 = vmatprep.subr.mxu0 0.0
    %224 = vmatpush1.msra.mxu0 0.0
    %225 = vmatprep.subr.mxu0 0.0
    %226 = vmatpush1.msra.mxu0 0.0
    %227 = vmatprep.subr.mxu0 0.0
    %228 = vmatpush1.msra.mxu0 0.0
    %229 = vmatprep.subr.mxu0 0.0
    %230 = vmatpush1.msra.mxu0 0.0
    %231 = vmatprep.subr.mxu0 0.0
    %232 = vmatpush1.msra.mxu0 0.0
    %233 = vmatprep.subr.mxu0 0.0
    %234 = vmatpush1.msra.mxu0 0.0
    %235 = vmatprep.subr.mxu0 0.0
    %236 = vmatpush1.msra.mxu0 0.0
    %237 = vmatprep.mubr.f32.mxu0 0.0
    %238 = vmatmul.mubr.f32.gmra.mrb[0].mxu0 %v100
    %v239 = vpop.f32.mrb[0].mxu0
    %v240 = vadd.f32 %v89, %v239
    %v241 = vpop.f32.mrb[0].mxu0
    %v242 = vadd.f32 %v93, %v241
    %243 = vdwg.mxu0
    %v244 = vmax.f32 %v169, 0.0
    %v245 = vmax.f32 %v171, 0.0
    %v246 = vmax.f32 %v240, 0.0
    %v247 = vmax.f32 %v242, 0.0
    %v248 = vmax.f32 %v244, %v246
    %v249 = vmax.f32 %v245, %v247
    %v250 = vld [vmem:[#allocation4] sm:$0xff]
    %v251 = vld [vmem:[#allocation4 + $0x8] sm:$0xff]
    %v252 = vld [vmem:[#allocation4 + $0x10] sm:$0xff]
    %v253 = vld [vmem:[#allocation4 + $0x18] sm:$0xff]
    %v254 = vld [vmem:[#allocation4 + $0x20] sm:$0xff]
    %v255 = vld [vmem:[#allocation4 + $0x28] sm:$0xff]
    %v256 = vld [vmem:[#allocation4 + $0x30] sm:$0xff]
    %v257 = vld [vmem:[#allocation4 + $0x38] sm:$0xff]
    %v258 = vld [vmem:[#allocation4 + $0x40] sm:$0xff]
    %v259 = vld [vmem:[#allocation4 + $0x48] sm:$0xff]
    %v260 = vld [vmem:[#allocation4 + $0x50] sm:$0xff]
    %v261 = vld [vmem:[#allocation4 + $0x58] sm:$0xff]
    %v262 = vld [vmem:[#allocation4 + $0x60] sm:$0xff]
    %v263 = vld [vmem:[#allocation4 + $0x68] sm:$0xff]
    %v264 = vld [vmem:[#allocation4 + $0x70] sm:$0xff]
    %v265 = vld [vmem:[#allocation4 + $0x78] sm:$0xff]
    %v266 = vld [vmem:[#allocation4 + $0x80] sm:$0xff]
    %v267 = vld [vmem:[#allocation4 + $0x88] sm:$0xff]
    %v268 = vld [vmem:[#allocation4 + $0x90] sm:$0xff]
    %v269 = vld [vmem:[#allocation4 + $0x98] sm:$0xff]
    %v270 = vld [vmem:[#allocation4 + $0xa0] sm:$0xff]
    %v271 = vld [vmem:[#allocation4 + $0xa8] sm:$0xff]
    %v272 = vld [vmem:[#allocation4 + $0xb0] sm:$0xff]
    %v273 = vld [vmem:[#allocation4 + $0xb8] sm:$0xff]
    %v274 = vld [vmem:[#allocation4 + $0xc0] sm:$0xff]
    %v275 = vld [vmem:[#allocation4 + $0xc8] sm:$0xff]
    %v276 = vld [vmem:[#allocation4 + $0xd0] sm:$0xff]
    %v277 = vld [vmem:[#allocation4 + $0xd8] sm:$0xff]
    %v278 = vld [vmem:[#allocation4 + $0xe0] sm:$0xff]
    %v279 = vld [vmem:[#allocation4 + $0xe8] sm:$0xff]
    %v280 = vld [vmem:[#allocation4 + $0xf0] sm:$0xff]
    %v281 = vld [vmem:[#allocation4 + $0xf8] sm:$0xff]
    %v282 = vld [vmem:[#allocation4 + $0x100] sm:$0xff]
    %v283 = vld [vmem:[#allocation4 + $0x108] sm:$0xff]
    %v284 = vld [vmem:[#allocation4 + $0x110] sm:$0xff]
    %v285 = vld [vmem:[#allocation4 + $0x118] sm:$0xff]
    %v286 = vld [vmem:[#allocation4 + $0x120] sm:$0xff]
    %v287 = vld [vmem:[#allocation4 + $0x128] sm:$0xff]
    %v288 = vld [vmem:[#allocation4 + $0x130] sm:$0xff]
    %v289 = vld [vmem:[#allocation4 + $0x138] sm:$0xff]
    %v290 = vld [vmem:[#allocation4 + $0x140] sm:$0xff]
    %v291 = vld [vmem:[#allocation4 + $0x148] sm:$0xff]
    %v292 = vld [vmem:[#allocation4 + $0x150] sm:$0xff]
    %v293 = vld [vmem:[#allocation4 + $0x158] sm:$0xff]
    %v294 = vld [vmem:[#allocation4 + $0x160] sm:$0xff]
    %v295 = vld [vmem:[#allocation4 + $0x168] sm:$0xff]
    %v296 = vld [vmem:[#allocation4 + $0x170] sm:$0xff]
    %v297 = vld [vmem:[#allocation4 + $0x178] sm:$0xff]
    %v298 = vld [vmem:[#allocation4 + $0x180] sm:$0xff]
    %v299 = vld [vmem:[#allocation4 + $0x188] sm:$0xff]
    %v300 = vld [vmem:[#allocation4 + $0x190] sm:$0xff]
    %v301 = vld [vmem:[#allocation4 + $0x198] sm:$0xff]
    %v302 = vld [vmem:[#allocation4 + $0x1a0] sm:$0xff]
    %v303 = vld [vmem:[#allocation4 + $0x1a8] sm:$0xff]
    %v304 = vld [vmem:[#allocation4 + $0x1b0] sm:$0xff]
    %v305 = vld [vmem:[#allocation4 + $0x1b8] sm:$0xff]
    %v306 = vld [vmem:[#allocation4 + $0x1c0] sm:$0xff]
    %v307 = vld [vmem:[#allocation4 + $0x1c8] sm:$0xff]
    %v308 = vld [vmem:[#allocation4 + $0x1d0] sm:$0xff]
    %v309 = vld [vmem:[#allocation4 + $0x1d8] sm:$0xff]
    %v310 = vld [vmem:[#allocation4 + $0x1e0] sm:$0xff]
    %v311 = vld [vmem:[#allocation4 + $0x1e8] sm:$0xff]
    %v312 = vld [vmem:[#allocation4 + $0x1f0] sm:$0xff]
    %v313 = vld [vmem:[#allocation4 + $0x1f8] sm:$0xff]
    %v314 = vld [vmem:[%s4] sm:$0x3]
    %v316 = vlaneseq
    %v317 = vshrl.u32 %v316, 7
    %v318 = vsub.s32 0, %v317
    %v319 = vrot.slane %v314, %v318
    %v320 = vlaneseq
    %v321 = vshrl.u32 %v320, 7
    %v322 = vsub.s32 1, %v321
    %v323 = vrot.slane %v314, %v322
    %326 = vmatprep.subr.mxu0 %v251
    %327 = vmatpush1.msra.mxu0 %v250
    %328 = vmatprep.subr.mxu0 %v253
    %329 = vmatpush1.msra.mxu0 %v252
    %330 = vmatprep.subr.mxu0 %v255
    %331 = vmatpush1.msra.mxu0 %v254
    %332 = vmatprep.subr.mxu0 %v257
    %333 = vmatpush1.msra.mxu0 %v256
    %334 = vmatprep.subr.mxu0 %v259
    %335 = vmatpush1.msra.mxu0 %v258
    %336 = vmatprep.subr.mxu0 %v261
    %337 = vmatpush1.msra.mxu0 %v260
    %338 = vmatprep.subr.mxu0 %v263
    %339 = vmatpush1.msra.mxu0 %v262
    %340 = vmatprep.subr.mxu0 %v265
    %341 = vmatpush1.msra.mxu0 %v264
    %342 = vmatprep.subr.mxu0 %v267
    %343 = vmatpush1.msra.mxu0 %v266
    %344 = vmatprep.subr.mxu0 %v269
    %345 = vmatpush1.msra.mxu0 %v268
    %346 = vmatprep.subr.mxu0 %v271
    %347 = vmatpush1.msra.mxu0 %v270
    %348 = vmatprep.subr.mxu0 %v273
    %349 = vmatpush1.msra.mxu0 %v272
    %350 = vmatprep.subr.mxu0 %v275
    %351 = vmatpush1.msra.mxu0 %v274
    %352 = vmatprep.subr.mxu0 %v277
    %353 = vmatpush1.msra.mxu0 %v276
    %354 = vmatprep.subr.mxu0 %v279
    %355 = vmatpush1.msra.mxu0 %v278
    %356 = vmatprep.subr.mxu0 %v281
    %357 = vmatpush1.msra.mxu0 %v280
    %358 = vmatprep.subr.mxu0 %v283
    %359 = vmatpush1.msra.mxu0 %v282
    %360 = vmatprep.subr.mxu0 %v285
    %361 = vmatpush1.msra.mxu0 %v284
    %362 = vmatprep.subr.mxu0 %v287
    %363 = vmatpush1.msra.mxu0 %v286
    %364 = vmatprep.subr.mxu0 %v289
    %365 = vmatpush1.msra.mxu0 %v288
    %366 = vmatprep.subr.mxu0 %v291
    %367 = vmatpush1.msra.mxu0 %v290
    %368 = vmatprep.subr.mxu0 %v293
    %369 = vmatpush1.msra.mxu0 %v292
    %370 = vmatprep.subr.mxu0 %v295
    %371 = vmatpush1.msra.mxu0 %v294
    %372 = vmatprep.subr.mxu0 %v297
    %373 = vmatpush1.msra.mxu0 %v296
    %374 = vmatprep.subr.mxu0 %v299
    %375 = vmatpush1.msra.mxu0 %v298
    %376 = vmatprep.subr.mxu0 %v301
    %377 = vmatpush1.msra.mxu0 %v300
    %378 = vmatprep.subr.mxu0 %v303
    %379 = vmatpush1.msra.mxu0 %v302
    %380 = vmatprep.subr.mxu0 %v305
    %381 = vmatpush1.msra.mxu0 %v304
    %382 = vmatprep.subr.mxu0 %v307
    %383 = vmatpush1.msra.mxu0 %v306
    %384 = vmatprep.subr.mxu0 %v309
    %385 = vmatpush1.msra.mxu0 %v308
    %386 = vmatprep.subr.mxu0 %v311
    %387 = vmatpush1.msra.mxu0 %v310
    %388 = vmatprep.subr.mxu0 %v313
    %389 = vmatpush1.msra.mxu0 %v312
    %390 = vmatprep.mubr.f32.mxu0 %v249
    %391 = vmatmul.mubr.f32.gmra.mrb[0].mxu0 %v248
    %v392 = vpop.f32.mrb[0].mxu0
    %v393 = vadd.f32 %v319, %v392
    %v394 = vpop.f32.mrb[0].mxu0
    %v395 = vadd.f32 %v323, %v394
    %396 = vdwg.mxu0
    %v397 = vmax.f32 %v393, 0.0
    %v398 = vmax.f32 %v395, 0.0
    %v399 = vld [vmem:[#allocation6] sm:$0xff]
    %v400 = vld [vmem:[#allocation6 + $0x8] sm:$0xff]
    %v401 = vld [vmem:[#allocation6 + $0x10] sm:$0xff]
    %v402 = vld [vmem:[#allocation6 + $0x18] sm:$0xff]
    %v403 = vld [vmem:[#allocation6 + $0x20] sm:$0xff]
    %v404 = vld [vmem:[#allocation6 + $0x28] sm:$0xff]
    %v405 = vld [vmem:[#allocation6 + $0x30] sm:$0xff]
    %v406 = vld [vmem:[#allocation6 + $0x38] sm:$0xff]
    %v407 = vld [vmem:[#allocation6 + $0x40] sm:$0xff]
    %v408 = vld [vmem:[#allocation6 + $0x48] sm:$0xff]
    %v409 = vld [vmem:[#allocation6 + $0x50] sm:$0xff]
    %v410 = vld [vmem:[#allocation6 + $0x58] sm:$0xff]
    %v411 = vld [vmem:[#allocation6 + $0x60] sm:$0xff]
    %v412 = vld [vmem:[#allocation6 + $0x68] sm:$0xff]
    %v413 = vld [vmem:[#allocation6 + $0x70] sm:$0xff]
    %v414 = vld [vmem:[#allocation6 + $0x78] sm:$0xff]
    %v415 = vld [vmem:[#allocation6 + $0x80] sm:$0xff]
    %v416 = vld [vmem:[#allocation6 + $0x88] sm:$0xff]
    %v417 = vld [vmem:[#allocation6 + $0x90] sm:$0xff]
    %v418 = vld [vmem:[#allocation6 + $0x98] sm:$0xff]
    %v419 = vld [vmem:[#allocation6 + $0xa0] sm:$0xff]
    %v420 = vld [vmem:[#allocation6 + $0xa8] sm:$0xff]
    %v421 = vld [vmem:[#allocation6 + $0xb0] sm:$0xff]
    %v422 = vld [vmem:[#allocation6 + $0xb8] sm:$0xff]
    %v423 = vld [vmem:[#allocation6 + $0xc0] sm:$0xff]
    %v424 = vld [vmem:[#allocation6 + $0xc8] sm:$0xff]
    %v425 = vld [vmem:[#allocation6 + $0xd0] sm:$0xff]
    %v426 = vld [vmem:[#allocation6 + $0xd8] sm:$0xff]
    %v427 = vld [vmem:[#allocation6 + $0xe0] sm:$0xff]
    %v428 = vld [vmem:[#allocation6 + $0xe8] sm:$0xff]
    %v429 = vld [vmem:[#allocation6 + $0xf0] sm:$0xff]
    %v430 = vld [vmem:[#allocation6 + $0xf8] sm:$0xff]
    %v431 = vld [vmem:[%s6] sm:$0x1]
    %v433 = vlaneseq
    %v434 = vshrl.u32 %v433, 7
    %v435 = vsub.s32 0, %v434
    %v436 = vrot.slane %v431, %v435
    %438 = vmatprep.subr.mxu0 0.0
    %439 = vmatpush1.msra.mxu0 %v399
    %440 = vmatprep.subr.mxu0 0.0
    %441 = vmatpush1.msra.mxu0 %v400
    %442 = vmatprep.subr.mxu0 0.0
    %443 = vmatpush1.msra.mxu0 %v401
    %444 = vmatprep.subr.mxu0 0.0
    %445 = vmatpush1.msra.mxu0 %v402
    %446 = vmatprep.subr.mxu0 0.0
    %447 = vmatpush1.msra.mxu0 %v403
    %448 = vmatprep.subr.mxu0 0.0
    %449 = vmatpush1.msra.mxu0 %v404
    %450 = vmatprep.subr.mxu0 0.0
    %451 = vmatpush1.msra.mxu0 %v405
    %452 = vmatprep.subr.mxu0 0.0
    %453 = vmatpush1.msra.mxu0 %v406
    %454 = vmatprep.subr.mxu0 0.0
    %455 = vmatpush1.msra.mxu0 %v407
    %456 = vmatprep.subr.mxu0 0.0
    %457 = vmatpush1.msra.mxu0 %v408
    %458 = vmatprep.subr.mxu0 0.0
    %459 = vmatpush1.msra.mxu0 %v409
    %460 = vmatprep.subr.mxu0 0.0
    %461 = vmatpush1.msra.mxu0 %v410
    %462 = vmatprep.subr.mxu0 0.0
    %463 = vmatpush1.msra.mxu0 %v411
    %464 = vmatprep.subr.mxu0 0.0
    %465 = vmatpush1.msra.mxu0 %v412
    %466 = vmatprep.subr.mxu0 0.0
    %467 = vmatpush1.msra.mxu0 %v413
    %468 = vmatprep.subr.mxu0 0.0
    %469 = vmatpush1.msra.mxu0 %v414
    %470 = vmatprep.subr.mxu0 0.0
    %471 = vmatpush1.msra.mxu0 %v415
    %472 = vmatprep.subr.mxu0 0.0
    %473 = vmatpush1.msra.mxu0 %v416
    %474 = vmatprep.subr.mxu0 0.0
    %475 = vmatpush1.msra.mxu0 %v417
    %476 = vmatprep.subr.mxu0 0.0
    %477 = vmatpush1.msra.mxu0 %v418
    %478 = vmatprep.subr.mxu0 0.0
    %479 = vmatpush1.msra.mxu0 %v419
    %480 = vmatprep.subr.mxu0 0.0
    %481 = vmatpush1.msra.mxu0 %v420
    %482 = vmatprep.subr.mxu0 0.0
    %483 = vmatpush1.msra.mxu0 %v421
    %484 = vmatprep.subr.mxu0 0.0
    %485 = vmatpush1.msra.mxu0 %v422
    %486 = vmatprep.subr.mxu0 0.0
    %487 = vmatpush1.msra.mxu0 %v423
    %488 = vmatprep.subr.mxu0 0.0
    %489 = vmatpush1.msra.mxu0 %v424
    %490 = vmatprep.subr.mxu0 0.0
    %491 = vmatpush1.msra.mxu0 %v425
    %492 = vmatprep.subr.mxu0 0.0
    %493 = vmatpush1.msra.mxu0 %v426
    %494 = vmatprep.subr.mxu0 0.0
    %495 = vmatpush1.msra.mxu0 %v427
    %496 = vmatprep.subr.mxu0 0.0
    %497 = vmatpush1.msra.mxu0 %v428
    %498 = vmatprep.subr.mxu0 0.0
    %499 = vmatpush1.msra.mxu0 %v429
    %500 = vmatprep.subr.mxu0 0.0
    %501 = vmatpush1.msra.mxu0 %v430
    %502 = vmatprep.mubr.f32.mxu0 %v398
    %503 = vmatmul.mubr.f32.gmra.mrb[0].mxu0 %v397
    %v504 = vpop.f32.mrb[0].mxu0
    %v505 = vadd.f32 %v436, %v504
    %v506 = vpop.f32.mrb[0].mxu0
    %507 = vdwg.mxu0
    %508 = vst [vmem:[%s7] sm:$0xff] %v505
    // Predicated region
    $region42: #{cnn_layer_forward.1} parent=1 // pred_check
      _
    $region43: #{cnn_layer_forward.1} parent=1 // pred_check_branch
      %510 = sbr.rel (0) target = $region45
    $region44: #{cnn_layer_forward.1} parent=1 // pred_region
      _
    $region45: #{cnn_layer_forward.1} parent=1 // pred_fallthru
      _
    // Predicated region
    $region46: #{cnn_layer_forward.1} parent=1 // pred_check
      _
    $region47: #{cnn_layer_forward.1} parent=1 // pred_check_branch
      %512 = sbr.rel (0) target = $region49
    $region48: #{cnn_layer_forward.1} parent=1 // pred_region
      _
    $region49: #{cnn_layer_forward.1} parent=1 // pred_fallthru
      _
    %513 = vsyncpa [#allocation3], 1
    %514 = vsyncpa [#allocation5], 1

</llo_original>
